<compile_context>
chip_gen: v5e
topology: v5e:2x2
jax: 0.10.0
libtpu: 0.0.40
codegen_flags: <defaults>
</compile_context>

<pallas_src>
import functools

import jax
import jax.numpy as jnp
from jax.experimental import pallas as pl
from jax.experimental.pallas import tpu as pltpu


def _conv1d_kernel(x_ref, w_ref, b_ref, o_ref, *, kernel_size, pad, seq_len):
    """Fused 'same'-padding Conv1d over the seq axis for one row-tile.

    x_ref: (TM, H)   f32   TM = (#batch elems in tile) * seq_len; tile edges
                           coincide with batch edges
    w_ref: (K*H, H)  bf16  w_ref[k*H + c, o] == torch_weight[o, c, k]
    b_ref: (1, H)    f32
    o_ref: (TM, H)   f32
    """
    tm, h = x_ref.shape
    nb = tm // seq_len                       # whole batch elements per tile (static)

    # Single f32->bf16 cast: all subsequent shift/mask/concat traffic is bf16
    # and the MXU gets its native operand dtype.  HBM still sees one f32 read.
    x = x_ref[...].astype(jnp.bfloat16)

    # Position of each row inside its own sequence (block edges are batch
    # edges, so `row % seq_len` is exact).  Only needed when a tile spans more
    # than one batch element (interior batch boundaries need masking).
    if nb > 1:
        row_in_seq = jax.lax.broadcasted_iota(jnp.int32, (tm, 1), 0) % seq_len

    taps = []
    for k in range(kernel_size):             # K is tiny & static -> unrolled
        d = k - pad                          # tap offset in unpadded coords
        if d == 0:                           # centre tap: never out of range
            taps.append(x)
            continue
        if d > 0:
            shifted = jnp.concatenate(
                [x[d:, :], jnp.zeros((d, h), x.dtype)], axis=0)
        else:
            shifted = jnp.concatenate(
                [jnp.zeros((-d, h), x.dtype), x[:tm + d, :]], axis=0)
        if nb > 1:
            # Zero rows whose tap lands outside this row's own sequence
            # (conv zero-padding + batch-boundary masking in one predicate).
            valid = jnp.logical_and(row_in_seq + d >= 0,
                                    row_in_seq + d < seq_len)
            shifted = jnp.where(valid, shifted, jnp.zeros_like(shifted))
        taps.append(shifted)

    x_cat = jnp.concatenate(taps, axis=1)              # (TM, K*H) bf16
    acc = jnp.dot(x_cat, w_ref[...],                   # single MXU matmul
                  preferred_element_type=jnp.float32)  # (TM, H) f32
    o_ref[...] = (acc + b_ref[...]).astype(o_ref.dtype)


def _rows_per_block(batch, seq_len, target_rows=512):
    """Rows per grid step: whole batch elements, ~target_rows, sublane-friendly."""
    divisors = [d for d in range(1, batch + 1) if batch % d == 0]
    # second-to-last block dim must be a multiple of 8 unless it is the full dim
    valid = [d for d in divisors if (d * seq_len) % 8 == 0] or [batch]
    for d in valid:
        if d * seq_len >= target_rows:
            return d
    return valid[-1]


def cnn_forward(x, weight, bias, *, kernel_size):
    """x: (B, L, H) f32; weight: (H_out, H_in, K) torch layout; bias: (H,)."""
    B, L, H = x.shape
    pad = (kernel_size - 1) // 2
    assert kernel_size % 2 == 1, (
        "even kernel_size gives L_out = L - 1 in PyTorch; this fused kernel "
        "implements the 'same'-length (odd kernel_size) case")

    # (H_out, H_in, K) -> (K*H_in, H_out); tap-k panel occupies rows [k*H,(k+1)*H)
    w2 = jnp.transpose(weight, (2, 1, 0)).reshape(kernel_size * H, H)
    w2 = w2.astype(jnp.bfloat16)           # native MXU dtype; accumulate in f32
    b2 = bias.reshape(1, H).astype(jnp.float32)

    x_flat = x.reshape(B * L, H)           # fold batch+seq into the matmul M dim
    nb = _rows_per_block(B, L)
    tm = nb * L
    grid = (B * L // tm,)

    kernel = functools.partial(_conv1d_kernel, kernel_size=kernel_size,
                               pad=pad, seq_len=L)

    cost = pl.CostEstimate(
        flops=2 * B * L * H * H * kernel_size,
        transcendentals=0,
        bytes_accessed=(x_flat.size * 4 + w2.size * 2 + b2.size * 4
                        + B * L * H * 4),
    )

    out_flat = pl.pallas_call(
        kernel,
        out_shape=jax.ShapeDtypeStruct((B * L, H), x.dtype),
        grid_spec=pltpu.PrefetchScalarGridSpec(
            num_scalar_prefetch=0,
            grid=grid,
            in_specs=[
                pl.BlockSpec((tm, H), lambda i: (i, 0)),
                pl.BlockSpec((kernel_size * H, H), lambda i: (0, 0)),
                pl.BlockSpec((1, H), lambda i: (0, 0)),
            ],
            out_specs=pl.BlockSpec((tm, H), lambda i: (i, 0)),
        ),
        compiler_params=pltpu.CompilerParams(
            dimension_semantics=("parallel",)),
        cost_estimate=cost,
    )(x_flat, w2, b2)

    return out_flat.reshape(B, L, H)


def _reference(x, weight, bias, *, kernel_size):
    """Pure-JAX f32 reference matching nn.Conv1d(H, H, K, padding=(K-1)//2)."""
    pad = (kernel_size - 1) // 2
    x_pad = jnp.pad(x, ((0, 0), (pad, pad), (0, 0)))
    L_out = x.shape[1] + 2 * pad - kernel_size + 1
    out = jnp.broadcast_to(bias, (x.shape[0], L_out, bias.shape[0]))
    out = out.astype(jnp.float32)
    for k in range(kernel_size):
        # out[b,t,o] += sum_c x_pad[b,t+k,c] * weight[o,c,k]
        out = out + jnp.einsum('blc,oc->blo',
                               x_pad[:, k:k + L_out, :], weight[:, :, k])
    return out


if __name__ == "__main__":
    # config = {'kernel_size': 3, 'hidden_size': 32}
    kernel_size = 3
    hidden_size = 32
    batch, seq = 2, 8

    key = jax.random.PRNGKey(0)
    kx, kw, kb = jax.random.split(key, 3)

    x = jax.random.normal(kx, (batch, seq, hidden_size), dtype=jnp.float32)
    # deterministic param init (PyTorch-style uniform(-1/sqrt(fan_in), +))
    fan_in = hidden_size * kernel_size
    bound = 1.0 / (fan_in ** 0.5)
    weight = jax.random.uniform(kw, (hidden_size, hidden_size, kernel_size),
                                minval=-bound, maxval=bound, dtype=jnp.float32)
    bias = jax.random.uniform(kb, (hidden_size,),
                              minval=-bound, maxval=bound, dtype=jnp.float32)

    out = cnn_forward(x, weight, bias, kernel_size=kernel_size)
    out = jax.block_until_ready(out)

    ref = _reference(x, weight, bias, kernel_size=kernel_size)
    assert out.shape == (batch, seq, hidden_size), out.shape
    # bf16 MXU operands with f32 accumulation -> loosened tolerance
    assert jnp.allclose(out, ref, atol=1e-2, rtol=1e-2), "mismatch vs reference"

    print("KERNEL_OK")
</pallas_src>

<mosaic_0001>
module attributes {stable_mosaic.version = 11 : i64} {
  func.func @_conv1d_kernel(%arg0: i32, %arg1: memref<16x32xf32, #tpu.memory_space<vmem>>, %arg2: memref<96x32xbf16, #tpu.memory_space<vmem>>, %arg3: memref<1x32xf32, #tpu.memory_space<vmem>>, %arg4: memref<16x32xf32, #tpu.memory_space<vmem>>) attributes {dimension_semantics = [#tpu.dimension_semantics<parallel>], iteration_bounds = array<i64: 1>, scalar_prefetch = 0 : i64, scratch_operands = 0 : i64, tpu.core_type = #tpu.core_type<tc>, window_params = [{transform_indices = @transform_0, window_bounds = array<i64: 16, 32>}, {pipeline_mode = #tpu.pipeline_mode<synchronous>, transform_indices = @transform_1, window_bounds = array<i64: 96, 32>}, {pipeline_mode = #tpu.pipeline_mode<synchronous>, transform_indices = @transform_2, window_bounds = array<i64: 1, 32>}, {transform_indices = @transform_3, window_bounds = array<i64: 16, 32>}]} {
    %c0 = arith.constant 0 : index
    %c0_0 = arith.constant 0 : index
    %0 = vector.load %arg1[%c0, %c0_0] : memref<16x32xf32, #tpu.memory_space<vmem>>, vector<16x32xf32>
    %1 = arith.truncf %0 : vector<16x32xf32> to vector<16x32xbf16>
    %2 = tpu.iota {dimensions = array<i32: 0>} : vector<16x1xi32>
    %c8_i32 = arith.constant 8 : i32
    %c0_i32 = arith.constant 0 : i32
    %3 = arith.cmpi eq, %c8_i32, %c0_i32 : i32
    %c1_i32 = arith.constant 1 : i32
    %4 = arith.select %3, %c1_i32, %c8_i32 : i32
    %5 = vector.broadcast %4 : i32 to vector<16x1xi32>
    %6 = arith.remsi %2, %5 : vector<16x1xi32>
    %c0_i32_1 = arith.constant 0 : i32
    %7 = vector.broadcast %c0_i32_1 : i32 to vector<16x1xi32>
    %8 = arith.cmpi ne, %6, %7 : vector<16x1xi32>
    %c0_i32_2 = arith.constant 0 : i32
    %9 = vector.broadcast %c0_i32_2 : i32 to vector<16x1xi32>
    %10 = arith.cmpi slt, %6, %9 : vector<16x1xi32>
    %c0_i32_3 = arith.constant 0 : i32
    %11 = arith.cmpi slt, %4, %c0_i32_3 : i32
    %12 = vector.broadcast %11 : i1 to vector<16x1xi1>
    %13 = vector.broadcast %12 : vector<16x1xi1> to vector<16x1xi1>
    %14 = arith.xori %10, %13 : vector<16x1xi1>
    %15 = arith.andi %14, %8 : vector<16x1xi1>
    %16 = vector.broadcast %4 : i32 to vector<16x1xi32>
    %17 = arith.addi %6, %16 : vector<16x1xi32>
    %18 = arith.select %15, %17, %6 : vector<16x1xi1>, vector<16x1xi32>
    %cst = arith.constant 0.000000e+00 : bf16
    %19 = vector.broadcast %cst : bf16 to vector<1x32xbf16>
    %20 = vector.extract_strided_slice %1 {offsets = [0, 0], sizes = [15, 32], strides = [1, 1]} : vector<16x32xbf16> to vector<15x32xbf16>
    %21 = tpu.concatenate %19, %20 in 0 : vector<1x32xbf16>, vector<15x32xbf16> -> vector<16x32xbf16>
    %c-1_i32 = arith.constant -1 : i32
    %22 = vector.broadcast %c-1_i32 : i32 to vector<16x1xi32>
    %23 = arith.addi %18, %22 : vector<16x1xi32>
    %c0_i32_4 = arith.constant 0 : i32
    %24 = vector.broadcast %c0_i32_4 : i32 to vector<16x1xi32>
    %25 = arith.cmpi sge, %23, %24 : vector<16x1xi32>
    %c-1_i32_5 = arith.constant -1 : i32
    %26 = vector.broadcast %c-1_i32_5 : i32 to vector<16x1xi32>
    %27 = arith.addi %18, %26 : vector<16x1xi32>
    %c8_i32_6 = arith.constant 8 : i32
    %28 = vector.broadcast %c8_i32_6 : i32 to vector<16x1xi32>
    %29 = arith.cmpi slt, %27, %28 : vector<16x1xi32>
    %30 = arith.andi %25, %29 : vector<16x1xi1>
    %cst_7 = arith.constant 0.000000e+00 : bf16
    %31 = vector.broadcast %cst_7 : bf16 to vector<16x32xbf16>
    %32 = vector.shape_cast %30 : vector<16x1xi1> to vector<16x1xi1>
    %33 = vector.broadcast %32 : vector<16x1xi1> to vector<16x32xi1>
    %34 = arith.select %33, %21, %31 : vector<16x32xi1>, vector<16x32xbf16>
    %35 = vector.extract_strided_slice %1 {offsets = [1, 0], sizes = [15, 32], strides = [1, 1]} : vector<16x32xbf16> to vector<15x32xbf16>
    %cst_8 = arith.constant 0.000000e+00 : bf16
    %36 = vector.broadcast %cst_8 : bf16 to vector<1x32xbf16>
    %37 = tpu.concatenate %35, %36 in 0 : vector<15x32xbf16>, vector<1x32xbf16> -> vector<16x32xbf16>
    %c1_i32_9 = arith.constant 1 : i32
    %38 = vector.broadcast %c1_i32_9 : i32 to vector<16x1xi32>
    %39 = arith.addi %18, %38 : vector<16x1xi32>
    %c0_i32_10 = arith.constant 0 : i32
    %40 = vector.broadcast %c0_i32_10 : i32 to vector<16x1xi32>
    %41 = arith.cmpi sge, %39, %40 : vector<16x1xi32>
    %c1_i32_11 = arith.constant 1 : i32
    %42 = vector.broadcast %c1_i32_11 : i32 to vector<16x1xi32>
    %43 = arith.addi %18, %42 : vector<16x1xi32>
    %c8_i32_12 = arith.constant 8 : i32
    %44 = vector.broadcast %c8_i32_12 : i32 to vector<16x1xi32>
    %45 = arith.cmpi slt, %43, %44 : vector<16x1xi32>
    %46 = arith.andi %41, %45 : vector<16x1xi1>
    %cst_13 = arith.constant 0.000000e+00 : bf16
    %47 = vector.broadcast %cst_13 : bf16 to vector<16x32xbf16>
    %48 = vector.shape_cast %46 : vector<16x1xi1> to vector<16x1xi1>
    %49 = vector.broadcast %48 : vector<16x1xi1> to vector<16x32xi1>
    %50 = arith.select %49, %37, %47 : vector<16x32xi1>, vector<16x32xbf16>
    %51 = tpu.concatenate %34, %1, %50 in 1 : vector<16x32xbf16>, vector<16x32xbf16>, vector<16x32xbf16> -> vector<16x96xbf16>
    %c0_14 = arith.constant 0 : index
    %c0_15 = arith.constant 0 : index
    %52 = vector.load %arg2[%c0_14, %c0_15] : memref<96x32xbf16, #tpu.memory_space<vmem>>, vector<96x32xbf16>
    %cst_16 = arith.constant dense<0.000000e+00> : vector<16x32xf32>
    %53 = tpu.matmul %51, %52, %cst_16 {dimension_numbers = #tpu.dot_dimension_numbers<[1], [0], [0], [1], [0, 0, 1, 1], [], []>} : vector<16x96xbf16>, vector<96x32xbf16>, vector<16x32xf32> -> vector<16x32xf32>
    %c0_17 = arith.constant 0 : index
    %c0_18 = arith.constant 0 : index
    %54 = vector.load %arg3[%c0_17, %c0_18] : memref<1x32xf32, #tpu.memory_space<vmem>>, vector<1x32xf32>
    %55 = vector.broadcast %54 : vector<1x32xf32> to vector<16x32xf32>
    %56 = arith.addf %53, %55 : vector<16x32xf32>
    %c0_19 = arith.constant 0 : index
    %c0_20 = arith.constant 0 : index
    %57 = vector.load %arg4[%c0_19, %c0_20] : memref<16x32xf32, #tpu.memory_space<vmem>>, vector<16x32xf32>
    tpu.vector_store %arg4[%c0_19, %c0_20], %56 {strides = array<i32>} : memref<16x32xf32, #tpu.memory_space<vmem>>, vector<16x32xf32>,
    return
  }
  func.func @transform_0(%arg0: i32) -> (i32, i32) {
    %c0_i32 = arith.constant 0 : i32
    %c0_i32_0 = arith.constant 0 : i32
    return %arg0, %c0_i32 : i32, i32
  }
  func.func @transform_1(%arg0: i32) -> (i32, i32) {
    %c0_i32 = arith.constant 0 : i32
    %c0_i32_0 = arith.constant 0 : i32
    %c0_i32_1 = arith.constant 0 : i32
    return %c0_i32, %c0_i32_0 : i32, i32
  }
  func.func @transform_2(%arg0: i32) -> (i32, i32) {
    %c0_i32 = arith.constant 0 : i32
    %c0_i32_0 = arith.constant 0 : i32
    %c0_i32_1 = arith.constant 0 : i32
    return %c0_i32, %c0_i32_0 : i32, i32
  }
  func.func @transform_3(%arg0: i32) -> (i32, i32) {
    %c0_i32 = arith.constant 0 : i32
    %c0_i32_0 = arith.constant 0 : i32
    return %arg0, %c0_i32 : i32, i32
  }
}

</mosaic_0001>

<llo_original>
// kernel: tpu_custom_call.1
$region0: #{tpu_custom_call.1}
  #allocation0 [shape = 'u32[]', space=smem, size = 0x4, offset = 0x4, fixed_abs, tag = 'smem constant byte address 0x4 - core index']
  #allocation1 [shape = 'u32[72,128]{1,0:T(1,128)}', space=vmem, size = 0x9000, scoped, tag = 'internal scratch']
  %s0 = inlined_call_operand.vmem [shape: f32[16,32], index: 0, kind: input, shape index: {}]
  %s1 = inlined_call_operand.vmem [shape: bf16[96,32], index: 1, kind: input, shape index: {}]
  %s2 = inlined_call_operand.vmem [shape: f32[1,32], index: 2, kind: input, shape index: {}]
  %s3 = inlined_call_operand.hbm [shape: f32[16,32], index: 3, kind: output, shape index: {}]
  %s4 = sld [smem:[#allocation0]]
  $region22: #{tpu_custom_call.1} parent=0
    _
  %s6 = ssub.s32 1, %s4
  %s7 = scalar_select 0, %s6, %s4
  $region1: #{tpu_custom_call.1} parent=0
    #allocation2 [shape = 'u8[8192]{0}', space=vmem, size = 0x2000, scoped, tag = 'output window, operand 0, single buffered']
    #allocation3 [shape = 's32[1]{0}', space=sflag, size = 0x4, scoped, tag = 'scoped memory for tpu_custom_call.1']
    %8 = vsyncpa [#allocation3], 0
    // Predicated region
    $region2: #{tpu_custom_call.1} parent=1 // pred_check
      _
    $region3: #{tpu_custom_call.1} parent=1 // pred_check_branch
      %10 = sbr.rel (0) target = $region5
    $region4: #{tpu_custom_call.1} parent=1 // pred_region
      _
    $region5: #{tpu_custom_call.1} parent=1 // pred_fallthru
      _
    // Predicated region
    $region6: #{tpu_custom_call.1} parent=1 // pred_check
      _
    $region7: #{tpu_custom_call.1} parent=1 // pred_check_branch
      %12 = sbr.rel (0) target = $region9
    $region8: #{tpu_custom_call.1} parent=1 // pred_region
      _
    $region9: #{tpu_custom_call.1} parent=1 // pred_fallthru
      _
    // Predicated region
    $region10: #{tpu_custom_call.1} parent=1 // pred_check
      _
    $region11: #{tpu_custom_call.1} parent=1 // pred_check_branch
      %14 = sbr.rel (0) target = $region13
    $region12: #{tpu_custom_call.1} parent=1 // pred_region
      _
    $region13: #{tpu_custom_call.1} parent=1 // pred_fallthru
      _
    %v18 = vld [vmem:[%s0] sm:$0xff]
    %v19 = vld [vmem:[%s0 + $0x8] sm:$0xff]
    %v20 = vpack.c.bf16 %v18, %v18
    %v21 = vpack.c.bf16 %v19, %v19
    %v22 = vlaneseq
    %v23 = vshrl.u32 %v22, 7
    %v24 = vadd.s32 %v23, 8
    %vm25 = vcmp.lt.s32.totalorder %v23, 0
    %v26 = vsub.s32 0, %v23
    %v27 = vsel %vm25, %v26, %v23
    %v28 = vshrl.u32 %v27, 3
    %v29 = vand.u32 %v27, 7
    %v30 = vsub.s32 0, %v29
    %v31 = vsel %vm25, %v30, %v29
    %vm32 = vcmp.lt.s32.totalorder %v24, 0
    %v33 = vsub.s32 0, %v24
    %v34 = vsel %vm32, %v33, %v24
    %v35 = vshrl.u32 %v34, 3
    %v36 = vand.u32 %v34, 7
    %v37 = vsub.s32 0, %v36
    %v38 = vsel %vm32, %v37, %v36
    %vm39 = vcmp.ne.s32.totalorder %v31, 0
    %vm40 = vcmp.ne.s32.totalorder %v38, 0
    %vm41 = vcmp.lt.s32.totalorder %v31, 0
    %vm42 = vcmp.lt.s32.totalorder %v38, 0
    %vm43 = vmand %vm41, %vm39
    %vm44 = vmand %vm42, %vm40
    %v45 = vadd.s32 %v31, 8
    %v46 = vadd.s32 %v38, 8
    %v47 = vsel %vm43, %v45, %v31
    %v48 = vsel %vm44, %v46, %v38
    %v51 = vunpack.c.l.b16 %v20
    %v52 = vunpack.c.l.b16 %v21
    %v53 = vpack.c.b16 %v52, %v51
    %v55 = vshrl.u32 %v53, 16
    %v57 = vrot.slane %v55, 7
    %v58 = vshll.u32 %v53, 16
    %v60 = vor.u32 %v57, %v58
    %vm62 = vcmask 1040384
    %vm63 = vsmask.f32 256
    %vm64 = vmand %vm62, %vm63
    %v65 = vsel %vm64, 0, %v60
    %v66 = vadd.s32 %v47, 4294967295
    %v67 = vadd.s32 %v48, 4294967295
    %vm68 = vcmp.ge.s32.totalorder %v66, 0
    %vm69 = vcmp.ge.s32.totalorder %v67, 0
    %vm70 = vcmp.lt.s32.totalorder %v66, 8
    %vm71 = vcmp.lt.s32.totalorder %v67, 8
    %vm72 = vmand %vm68, %vm70
    %vm73 = vmand %vm69, %vm71
    %v74 = vsel %vm72, 1, 0
    %v75 = vsel %vm73, 1, 0
    %vm76 = vcmp.eq.s32.totalorder %v74, 1
    %vm77 = vcmp.eq.s32.totalorder %v75, 1
    %vm78 = vmpackc.low %vm76, %vm76
    %vm79 = vmpackc.low %vm77, %vm77
    %v80 = vsel %vm78, 65537, 0
    %v81 = vsel %vm79, 65537, 0
    %v82 = vunpack.c.l.b16 %v80
    %v83 = vunpack.c.l.b16 %v81
    %v84 = vpack.c.b16 %v83, %v82
    %v85 = vunpack.c.l.b16 %v84
    %v86 = vunpack.c.h.b16 %v84
    %v87 = vunpack.c.l.b16 0
    %v88 = vunpack.c.h.b16 0
    %vm89 = vcmp.ne.s32.totalorder %v85, %v87
    %vm90 = vcmp.ne.s32.totalorder %v86, %v88
    %vm91 = vmpackc.low %vm90, %vm89
    %v92 = vsel %vm91, %v65, 0
    %v93 = vrot.slane %v58, 1
    %v94 = vor.u32 %v55, %v93
    %vm96 = vcmask 1047552
    %vm97 = vsmask.f32 7424
    %vm98 = vmand %vm96, %vm97
    %v99 = vsel %vm98, %v94, 0
    %v100 = vadd.s32 %v47, 1
    %v101 = vadd.s32 %v48, 1
    %vm102 = vcmp.ge.s32.totalorder %v100, 0
    %vm103 = vcmp.ge.s32.totalorder %v101, 0
    %vm104 = vcmp.lt.s32.totalorder %v100, 8
    %vm105 = vcmp.lt.s32.totalorder %v101, 8
    %vm106 = vmand %vm102, %vm104
    %vm107 = vmand %vm103, %vm105
    %v108 = vsel %vm106, 1, 0
    %v109 = vsel %vm107, 1, 0
    %vm110 = vcmp.eq.s32.totalorder %v108, 1
    %vm111 = vcmp.eq.s32.totalorder %v109, 1
    %vm112 = vmpackc.low %vm110, %vm110
    %vm113 = vmpackc.low %vm111, %vm111
    %v114 = vsel %vm112, 65537, 0
    %v115 = vsel %vm113, 65537, 0
    %v116 = vunpack.c.l.b16 %v114
    %v117 = vunpack.c.l.b16 %v115
    %v118 = vpack.c.b16 %v117, %v116
    %v119 = vunpack.c.l.b16 %v118
    %v120 = vunpack.c.h.b16 %v118
    %v121 = vunpack.c.l.b16 0
    %v122 = vunpack.c.h.b16 0
    %vm123 = vcmp.ne.s32.totalorder %v119, %v121
    %vm124 = vcmp.ne.s32.totalorder %v120, %v122
    %vm125 = vmpackc.low %vm124, %vm123
    %v126 = vsel %vm125, %v99, 0
    %127 = vrot.lane.b32.xlu0 %v53, 32
    %v128 = vpop.permute.xlu0 %127
    %130 = vrot.lane.b32.xlu0 %v126, 64
    %v131 = vpop.permute.xlu0 %130
    %vm132 = vcmask 261120
    %v135 = vsel %vm132, %v92, %v128
    %vm136 = vcmask 523264
    %v138 = vsel %vm136, %v135, %v131
    %v139 = vld [vmem:[%s1] sm:$0xf]
    %v140 = vld [vmem:[%s1 + $0x4] sm:$0xf]
    %v141 = vld [vmem:[%s1 + $0x8] sm:$0xf]
    %v142 = vld [vmem:[%s1 + $0xc] sm:$0xf]
    %v143 = vld [vmem:[%s1 + $0x10] sm:$0xf]
    %v144 = vld [vmem:[%s1 + $0x14] sm:$0xf]
    %v145 = vld [vmem:[%s1 + $0x18] sm:$0xf]
    %v146 = vld [vmem:[%s1 + $0x1c] sm:$0xf]
    %v147 = vld [vmem:[%s1 + $0x20] sm:$0xf]
    %v148 = vld [vmem:[%s1 + $0x24] sm:$0xf]
    %v149 = vld [vmem:[%s1 + $0x28] sm:$0xf]
    %v150 = vld [vmem:[%s1 + $0x2c] sm:$0xf]
    %v151 = vld [vmem:[%s2] sm:$0x1]
    %v153 = vperm.slane %v151, 0
    %v167 = vunpack.c.l.b16 %v139
    %v168 = vunpack.c.l.b16 %v140
    %v169 = vunpack.c.l.b16 %v141
    %v170 = vunpack.c.l.b16 %v142
    %v171 = vunpack.c.l.b16 %v143
    %v172 = vunpack.c.l.b16 %v144
    %v173 = vunpack.c.l.b16 %v145
    %v174 = vunpack.c.l.b16 %v146
    %v175 = vunpack.c.l.b16 %v147
    %v176 = vunpack.c.l.b16 %v148
    %v177 = vunpack.c.l.b16 %v149
    %v178 = vunpack.c.l.b16 %v150
    %v179 = vpack.c.b16 %v168, %v167
    %v180 = vpack.c.b16 %v170, %v169
    %v181 = vpack.c.b16 %v172, %v171
    %v182 = vpack.c.b16 %v174, %v173
    %v183 = vpack.c.b16 %v176, %v175
    %v184 = vpack.c.b16 %v178, %v177
    %vm191 = vcmask 785408
    %v192 = vsel %vm191, %v138, 0
    %194 = vmatpush.bf16.msra.mxu0 0
    %195 = vmatpush.bf16.msra.mxu0 0
    %196 = vmatpush.bf16.msra.mxu0 %v184
    %197 = vmatpush.bf16.msra.mxu0 %v183
    %198 = vmatpush.bf16.msra.mxu0 %v182
    %199 = vmatpush.bf16.msra.mxu0 %v181
    %200 = vmatpush.bf16.msra.mxu0 %v180
    %201 = vmatpush.bf16.msra.mxu0 %v179
    %202 = vmatmul.bf16.gmra.mxu0 %v192
    %v203 = vpop.f32.mrf.mxu0
    %v204 = vadd.f32 %v153, %v203
    %v205 = vpop.f32.mrf.mxu0
    %v206 = vadd.f32 %v153, %v205
    %207 = vdwg.mxu0
    %208 = vst.msk [vmem:[#allocation2] sm:$0xff] %vm132, %v204
    %209 = vst.msk [vmem:[#allocation2 + $0x8] sm:$0xff] %vm132, %v206
    // Predicated region
    $region14: #{tpu_custom_call.1} parent=1 // pred_check
      _
    $region15: #{tpu_custom_call.1} parent=1 // pred_check_branch
      %211 = sbr.rel (0) target = $region17
    $region16: #{tpu_custom_call.1} parent=1 // pred_region
      %213 = vsyncadd [#allocation3], 0
      %s214 = sshll.u32 [#allocation2], 4
      %s215 = int_to_ptr.vmem [resolvable:$true] %s214
      %s216 = sshll.u32 %s3, 4
      %s217 = int_to_ptr.hbm [resolvable:$true] %s216
      %222 = dma.vmem_to_hbm [thread:$0]  %s215, 256, %s217, [#allocation3], 128, 128, 8
    $region17: #{tpu_custom_call.1} parent=1 // pred_fallthru
      _
    // Predicated region
    $region18: #{tpu_custom_call.1} parent=1 // pred_check
      _
    $region19: #{tpu_custom_call.1} parent=1 // pred_check_branch
      %224 = sbr.rel (0) target = $region21
    $region20: #{tpu_custom_call.1} parent=1 // pred_region
      %226 = dma.done [#allocation3], 256
    $region21: #{tpu_custom_call.1} parent=1 // pred_fallthru
      _
    %227 = vsyncpa [#allocation3], 1

</llo_original>
